<compile_context>
chip_gen: v7x
topology: tpu7x:2x2x1
jax: 0.10.0
libtpu: 0.0.40
codegen_flags: <defaults>
</compile_context>

<pallas_src>
import functools

import jax
import jax.numpy as jnp
from jax.experimental import pallas as pl
from jax.experimental.pallas import tpu as pltpu


_MIN_TILE_M = 256  # smallest "large batch" row tile (multiple of MXU height)


def _round_up(x, m):
    return ((x + m - 1) // m) * m


def _choose_block_m(M, block_m):
    """Pick the per-grid-step row tile.

    - multiple of 16 (bf16 sublane pack; also satisfies the (8, .) tiling rule)
    - single tile for small batches (< 2 * _MIN_TILE_M rows)
    - otherwise at least 2 grid steps (keeps both v7x TensorCores busy), tile a
      multiple of 256 and capped at block_m.
    """
    m16 = _round_up(M, 16)
    if m16 < 2 * _MIN_TILE_M:
        return m16
    bm = min(block_m, _round_up((m16 + 1) // 2, _MIN_TILE_M))
    return max(bm, _MIN_TILE_M)


def _projection_head_kernel(x_ref, w1_ref, b1_ref, w2_ref, b2_ref, o_ref):
    # Cast the x tile to the weight dtype here (cheap VPU work hidden under the
    # DMA) instead of an extra XLA cast pass over x in HBM.
    h = jnp.dot(x_ref[...].astype(w1_ref.dtype), w1_ref[...],
                preferred_element_type=jnp.float32)
    # Bias + ReLU in f32 on the VPU (b*_ref are (1, d_out) f32, broadcast rows).
    h = jnp.maximum(h + b1_ref[...], 0.0)
    out = jnp.dot(h.astype(w2_ref.dtype), w2_ref[...],
                  preferred_element_type=jnp.float32)
    o_ref[...] = (out + b2_ref[...]).astype(o_ref.dtype)


def prepare_projection_head_params(w1, b1, w2, b2, *, compute_dtype=jnp.float32):
    """One-time parameter prep (weight dtype cast + bias reshape to (1, d_out)),
    hoisted out of the per-call jitted path."""
    d_out = w1.shape[1]
    return (jnp.asarray(w1, compute_dtype),
            jnp.asarray(b1, jnp.float32).reshape(1, d_out),
            jnp.asarray(w2, compute_dtype),
            jnp.asarray(b2, jnp.float32).reshape(1, d_out))


@functools.partial(jax.jit, static_argnames=("block_m", "out_dtype"))
def projection_head_apply(x, w1, b1, w2, b2, *, block_m=2048, out_dtype=None):
    """x: (M, d_in); w1: (d_in, d_out); b1: (1, d_out); w2: (d_out, d_out); b2: (1, d_out)."""
    M, d_in = x.shape
    d_out = w1.shape[1]
    out_dtype = jnp.dtype(x.dtype if out_dtype is None else out_dtype)

    bm = _choose_block_m(M, block_m)
    grid_m = pl.cdiv(M, bm)  # ragged final tile: OOB rows are masked on store

    x_itemsize = jnp.dtype(x.dtype).itemsize
    w_itemsize = jnp.dtype(w1.dtype).itemsize

    # Working-set estimate: double-buffered x/out tiles + resident weights/biases
    # (double-buffered) + f32 intermediates. Cap at 32 MiB: half the v7x per-TC
    # VMEM and comfortably under v5e/v6e capacity.
    resident_bytes = 2 * ((d_in + d_out) * d_out * w_itemsize + 2 * d_out * 4)
    # TODO(synk): if resident weights outgrow ~1/4 of VMEM (huge d_in/d_out,
    # tightest on v7x's 64 MiB), switch W1 to K-tiling over d_in with an
    # "arbitrary" reduction axis instead of keeping it fully resident.
    tile_bytes = 2 * bm * (d_in * x_itemsize + d_out * out_dtype.itemsize)
    h_bytes = 2 * bm * d_out * 4
    need = resident_bytes + tile_bytes + h_bytes
    vmem_limit = int(min(max(1.5 * need + (4 << 20), 16 << 20), 32 << 20))

    flops = 2 * M * (d_in * d_out + d_out * d_out)
    bytes_accessed = (M * d_in * x_itemsize
                      + (d_in + d_out) * d_out * w_itemsize + 2 * d_out * 4
                      + M * d_out * out_dtype.itemsize)

    return pl.pallas_call(
        _projection_head_kernel,
        out_shape=jax.ShapeDtypeStruct((M, d_out), out_dtype),
        grid_spec=pltpu.PrefetchScalarGridSpec(
            num_scalar_prefetch=0,
            grid=(grid_m,),
            in_specs=[
                pl.BlockSpec((bm, d_in), lambda i: (i, 0)),      # x row tile
                pl.BlockSpec((d_in, d_out), lambda i: (0, 0)),   # W1 (resident)
                pl.BlockSpec((1, d_out), lambda i: (0, 0)),      # b1 (resident)
                pl.BlockSpec((d_out, d_out), lambda i: (0, 0)),  # W2 (resident)
                pl.BlockSpec((1, d_out), lambda i: (0, 0)),      # b2 (resident)
            ],
            out_specs=pl.BlockSpec((bm, d_out), lambda i: (i, 0)),
        ),
        compiler_params=pltpu.CompilerParams(
            dimension_semantics=("parallel",),
            vmem_limit_bytes=vmem_limit,
        ),
        cost_estimate=pl.CostEstimate(
            flops=flops, transcendentals=0, bytes_accessed=bytes_accessed),
    )(x, w1, b1, w2, b2)


def projection_head(x, w1, b1, w2, b2, *, compute_dtype=jnp.float32,
                    block_m=2048, out_dtype=None):
    """Convenience wrapper: prep params then apply (prefer prepping once)."""
    p = prepare_projection_head_params(w1, b1, w2, b2, compute_dtype=compute_dtype)
    return projection_head_apply(x, *p, block_m=block_m, out_dtype=out_dtype)


def init_projection_head_params(key, input_dim, output_dim=128, dtype=jnp.float32):
    """Deterministic init mimicking PyTorch nn.Linear default (uniform +/- 1/sqrt(fan_in))."""
    k1, k2, k3, k4 = jax.random.split(key, 4)
    bound1 = 1.0 / (input_dim ** 0.5)
    bound2 = 1.0 / (output_dim ** 0.5)
    # Stored as (in_features, out_features): equivalent to PyTorch weight.T
    w1 = jax.random.uniform(k1, (input_dim, output_dim), dtype, -bound1, bound1)
    b1 = jax.random.uniform(k2, (output_dim,), dtype, -bound1, bound1)
    w2 = jax.random.uniform(k3, (output_dim, output_dim), dtype, -bound2, bound2)
    b2 = jax.random.uniform(k4, (output_dim,), dtype, -bound2, bound2)
    return w1, b1, w2, b2


def projection_head_ref(x, w1, b1, w2, b2):
    h = jnp.maximum(x @ w1 + b1, 0.0)
    return h @ w2 + b2


if __name__ == "__main__":
    key = jax.random.PRNGKey(0)
    kx, kp = jax.random.split(key)

    batch = 8
    input_dim = 32
    output_dim = 128  # module default

    x = jax.random.normal(kx, (batch, input_dim), jnp.float32)
    w1, b1, w2, b2 = init_projection_head_params(kp, input_dim, output_dim)
    ref = projection_head_ref(x, w1, b1, w2, b2)

    # Exact f32 path (default): one-time param prep, then the jitted apply.
    p32 = prepare_projection_head_params(w1, b1, w2, b2)
    out_f32 = jax.block_until_ready(projection_head_apply(x, *p32))
    assert out_f32.shape == (batch, output_dim), out_f32.shape
    assert jnp.allclose(out_f32, ref, atol=1e-4, rtol=1e-4), "f32 mismatch vs reference"

    # Explicit bf16 fast path (f32 MXU accumulation) with bf16 output writeback.
    pbf16 = prepare_projection_head_params(w1, b1, w2, b2, compute_dtype=jnp.bfloat16)
    out_bf16 = jax.block_until_ready(
        projection_head_apply(x, *pbf16, out_dtype=jnp.bfloat16))
    assert out_bf16.shape == (batch, output_dim), out_bf16.shape
    assert jnp.allclose(out_bf16.astype(jnp.float32), ref, atol=5e-2, rtol=5e-2), \
        "bf16 mismatch vs reference"

    # Ragged batch: multi-step grid with a masked final tile and no jnp.pad
    # (M=1000 -> bm=512, grid=2, last tile holds 488 valid rows).
    x_big = jax.random.normal(kx, (1000, input_dim), jnp.float32)
    ref_big = projection_head_ref(x_big, w1, b1, w2, b2)
    out_big = jax.block_until_ready(projection_head_apply(x_big, *p32))
    assert out_big.shape == (1000, output_dim), out_big.shape
    assert jnp.allclose(out_big, ref_big, atol=1e-4, rtol=1e-4), "ragged-M mismatch"

    print("KERNEL_OK")
</pallas_src>

<mosaic_0001>
module attributes {stable_mosaic.version = 11 : i64} {
  func.func @_projection_head_kernel(%arg0: i32, %arg1: memref<16x32xf32, #tpu.memory_space<vmem>>, %arg2: memref<32x128xf32, #tpu.memory_space<vmem>>, %arg3: memref<1x128xf32, #tpu.memory_space<vmem>>, %arg4: memref<128x128xf32, #tpu.memory_space<vmem>>, %arg5: memref<1x128xf32, #tpu.memory_space<vmem>>, %arg6: memref<16x128xf32, #tpu.memory_space<vmem>>) attributes {dimension_semantics = [#tpu.dimension_semantics<parallel>], iteration_bounds = array<i64: 1>, scalar_prefetch = 0 : i64, scratch_operands = 0 : i64, tpu.core_type = #tpu.core_type<tc>, window_params = [{transform_indices = @transform_0, window_bounds = array<i64: 16, 32>}, {pipeline_mode = #tpu.pipeline_mode<synchronous>, transform_indices = @transform_1, window_bounds = array<i64: 32, 128>}, {pipeline_mode = #tpu.pipeline_mode<synchronous>, transform_indices = @transform_2, window_bounds = array<i64: 1, 128>}, {pipeline_mode = #tpu.pipeline_mode<synchronous>, transform_indices = @transform_3, window_bounds = array<i64: 128, 128>}, {pipeline_mode = #tpu.pipeline_mode<synchronous>, transform_indices = @transform_4, window_bounds = array<i64: 1, 128>}, {transform_indices = @transform_5, window_bounds = array<i64: 16, 128>}]} {
    %c0 = arith.constant 0 : index
    %c0_0 = arith.constant 0 : index
    %0 = vector.load %arg1[%c0, %c0_0] : memref<16x32xf32, #tpu.memory_space<vmem>>, vector<16x32xf32>
    %c0_1 = arith.constant 0 : index
    %c0_2 = arith.constant 0 : index
    %1 = vector.load %arg2[%c0_1, %c0_2] : memref<32x128xf32, #tpu.memory_space<vmem>>, vector<32x128xf32>
    %cst = arith.constant dense<0.000000e+00> : vector<16x128xf32>
    %2 = tpu.matmul %0, %1, %cst {dimension_numbers = #tpu.dot_dimension_numbers<[1], [0], [0], [1], [0, 0, 1, 1], [], []>} : vector<16x32xf32>, vector<32x128xf32>, vector<16x128xf32> -> vector<16x128xf32>
    %c0_3 = arith.constant 0 : index
    %c0_4 = arith.constant 0 : index
    %3 = vector.load %arg3[%c0_3, %c0_4] : memref<1x128xf32, #tpu.memory_space<vmem>>, vector<1x128xf32>
    %4 = vector.broadcast %3 : vector<1x128xf32> to vector<16x128xf32>
    %5 = arith.addf %2, %4 : vector<16x128xf32>
    %cst_5 = arith.constant 0.000000e+00 : f32
    %6 = vector.broadcast %cst_5 : f32 to vector<16x128xf32>
    %7 = arith.maximumf %5, %6 : vector<16x128xf32>
    %c0_6 = arith.constant 0 : index
    %c0_7 = arith.constant 0 : index
    %8 = vector.load %arg4[%c0_6, %c0_7] : memref<128x128xf32, #tpu.memory_space<vmem>>, vector<128x128xf32>
    %cst_8 = arith.constant dense<0.000000e+00> : vector<16x128xf32>
    %9 = tpu.matmul %7, %8, %cst_8 {dimension_numbers = #tpu.dot_dimension_numbers<[1], [0], [0], [1], [0, 0, 1, 1], [], []>} : vector<16x128xf32>, vector<128x128xf32>, vector<16x128xf32> -> vector<16x128xf32>
    %c0_9 = arith.constant 0 : index
    %c0_10 = arith.constant 0 : index
    %10 = vector.load %arg5[%c0_9, %c0_10] : memref<1x128xf32, #tpu.memory_space<vmem>>, vector<1x128xf32>
    %11 = vector.broadcast %10 : vector<1x128xf32> to vector<16x128xf32>
    %12 = arith.addf %9, %11 : vector<16x128xf32>
    %c0_11 = arith.constant 0 : index
    %c0_12 = arith.constant 0 : index
    %13 = vector.load %arg6[%c0_11, %c0_12] : memref<16x128xf32, #tpu.memory_space<vmem>>, vector<16x128xf32>
    tpu.vector_store %arg6[%c0_11, %c0_12], %12 {strides = array<i32>} : memref<16x128xf32, #tpu.memory_space<vmem>>, vector<16x128xf32>,
    return
  }
  func.func @transform_0(%arg0: i32) -> (i32, i32) {
    %c0_i32 = arith.constant 0 : i32
    %c0_i32_0 = arith.constant 0 : i32
    return %arg0, %c0_i32 : i32, i32
  }
  func.func @transform_1(%arg0: i32) -> (i32, i32) {
    %c0_i32 = arith.constant 0 : i32
    %c0_i32_0 = arith.constant 0 : i32
    %c0_i32_1 = arith.constant 0 : i32
    return %c0_i32, %c0_i32_0 : i32, i32
  }
  func.func @transform_2(%arg0: i32) -> (i32, i32) {
    %c0_i32 = arith.constant 0 : i32
    %c0_i32_0 = arith.constant 0 : i32
    %c0_i32_1 = arith.constant 0 : i32
    return %c0_i32, %c0_i32_0 : i32, i32
  }
  func.func @transform_3(%arg0: i32) -> (i32, i32) {
    %c0_i32 = arith.constant 0 : i32
    %c0_i32_0 = arith.constant 0 : i32
    %c0_i32_1 = arith.constant 0 : i32
    return %c0_i32, %c0_i32_0 : i32, i32
  }
  func.func @transform_4(%arg0: i32) -> (i32, i32) {
    %c0_i32 = arith.constant 0 : i32
    %c0_i32_0 = arith.constant 0 : i32
    %c0_i32_1 = arith.constant 0 : i32
    return %c0_i32, %c0_i32_0 : i32, i32
  }
  func.func @transform_5(%arg0: i32) -> (i32, i32) {
    %c0_i32 = arith.constant 0 : i32
    %c0_i32_0 = arith.constant 0 : i32
    return %arg0, %c0_i32 : i32, i32
  }
}

</mosaic_0001>

<llo_original>
// kernel: projection_head_apply.1
$region0: #{projection_head_apply.1}
  #allocation0 [shape = 'u32[]', space=smem, size = 0x4, offset = 0x4, fixed_abs, tag = 'smem constant byte address 0x4 - core index']
  #allocation1 [shape = 'u32[144,128]{1,0:T(1,128)}', space=vmem, size = 0x12000, scoped, tag = 'internal scratch']
  %s0 = inlined_call_operand.hbm [shape: f32[8,32], index: 0, kind: input, shape index: {}]
  %s1 = inlined_call_operand.hbm [shape: f32[32,128], index: 1, kind: input, shape index: {}]
  %s2 = inlined_call_operand.vmem [shape: f32[1,128], index: 2, kind: input, shape index: {}]
  %s3 = inlined_call_operand.hbm [shape: f32[128,128], index: 3, kind: input, shape index: {}]
  %s4 = inlined_call_operand.vmem [shape: f32[1,128], index: 4, kind: input, shape index: {}]
  %s5 = inlined_call_operand.hbm [shape: f32[8,128], index: 5, kind: output, shape index: {}]
  %s6 = sld [smem:[#allocation0]]
  $region42: #{projection_head_apply.1} parent=0
    _
  %s8 = ssub.s32 1, %s6
  %s9 = scalar_select 0, %s8, %s6
  $region1: #{projection_head_apply.1} parent=0
    #allocation2 [shape = 'u8[8192]{0}', space=vmem, size = 0x2000, scoped, tag = 'input window, operand 0, single buffered']
    #allocation3 [shape = 's32[1]{0}', space=sflag, size = 0x4, scoped, tag = 'scoped memory for projection_head_apply.1']
    #allocation4 [shape = 's32[1]{0}', space=sflag, size = 0x4, scoped, tag = 'scoped memory for projection_head_apply.1']
    #allocation5 [shape = 'u8[16384]{0}', space=vmem, size = 0x4000, scoped, tag = 'input window, operand 1, single buffered']
    #allocation6 [shape = 's32[1]{0}', space=sflag, size = 0x4, scoped, tag = 'scoped memory for projection_head_apply.1']
    #allocation7 [shape = 'u8[65536]{0}', space=vmem, size = 0x10000, scoped, tag = 'input window, operand 3, single buffered']
    #allocation8 [shape = 'u8[8192]{0}', space=vmem, size = 0x2000, scoped, tag = 'output window, operand 0, single buffered']
    %10 = vsyncpa [#allocation3], 0
    %11 = vsyncpa [#allocation6], 0
    %12 = vsyncpa [#allocation4], 0
    // Predicated region
    $region2: #{projection_head_apply.1} parent=1 // pred_check
      _
    $region3: #{projection_head_apply.1} parent=1 // pred_check_branch
      %14 = sbr.rel (0) target = $region5
    $region4: #{projection_head_apply.1} parent=1 // pred_region
      %s16 = ssub.s32 256, 128
      %17 = vsyncadd [#allocation3], %s16
      %s18 = sshll.u32 [#allocation2], 4
      %s19 = int_to_ptr.vmem [resolvable:$true] %s18
      %24 = dma.hbm_to_vmem [thread:$0]  %s0, 128, %s19, [#allocation3], 128, 128, 8
    $region5: #{projection_head_apply.1} parent=1 // pred_fallthru
      _
    // Predicated region
    $region6: #{projection_head_apply.1} parent=1 // pred_check
      _
    $region7: #{projection_head_apply.1} parent=1 // pred_check_branch
      %26 = sbr.rel (0) target = $region9
    $region8: #{projection_head_apply.1} parent=1 // pred_region
      %s28 = ssub.s32 512, 512
      %29 = vsyncadd [#allocation6], %s28
      %s30 = sshll.u32 [#allocation5], 4
      %s31 = int_to_ptr.vmem [resolvable:$true] %s30
      %36 = dma.hbm_to_vmem [thread:$0]  %s1, 512, %s31, [#allocation6], 128, 128, 8
    $region9: #{projection_head_apply.1} parent=1 // pred_fallthru
      _
    // Predicated region
    $region10: #{projection_head_apply.1} parent=1 // pred_check
      _
    $region11: #{projection_head_apply.1} parent=1 // pred_check_branch
      %38 = sbr.rel (0) target = $region13
    $region12: #{projection_head_apply.1} parent=1 // pred_region
      _
    $region13: #{projection_head_apply.1} parent=1 // pred_fallthru
      _
    // Predicated region
    $region14: #{projection_head_apply.1} parent=1 // pred_check
      _
    $region15: #{projection_head_apply.1} parent=1 // pred_check_branch
      %40 = sbr.rel (0) target = $region17
    $region16: #{projection_head_apply.1} parent=1 // pred_region
      %s42 = ssub.s32 2048, 2048
      %43 = vsyncadd [#allocation6], %s42
      %s44 = sshll.u32 [#allocation7], 4
      %s45 = int_to_ptr.vmem [resolvable:$true] %s44
      %50 = dma.hbm_to_vmem [thread:$0]  %s3, 2048, %s45, [#allocation6], 128, 128, 8
    $region17: #{projection_head_apply.1} parent=1 // pred_fallthru
      _
    // Predicated region
    $region18: #{projection_head_apply.1} parent=1 // pred_check
      _
    $region19: #{projection_head_apply.1} parent=1 // pred_check_branch
      %52 = sbr.rel (0) target = $region21
    $region20: #{projection_head_apply.1} parent=1 // pred_region
      _
    $region21: #{projection_head_apply.1} parent=1 // pred_fallthru
      _
    // Predicated region
    $region22: #{projection_head_apply.1} parent=1 // pred_check
      _
    $region23: #{projection_head_apply.1} parent=1 // pred_check_branch
      %54 = sbr.rel (0) target = $region25
    $region24: #{projection_head_apply.1} parent=1 // pred_region
      %55 = dma.done [#allocation3], 256
    $region25: #{projection_head_apply.1} parent=1 // pred_fallthru
      _
    // Predicated region
    $region26: #{projection_head_apply.1} parent=1 // pred_check
      _
    $region27: #{projection_head_apply.1} parent=1 // pred_check_branch
      %57 = sbr.rel (0) target = $region29
    $region28: #{projection_head_apply.1} parent=1 // pred_region
      %58 = dma.done [#allocation6], 512
    $region29: #{projection_head_apply.1} parent=1 // pred_fallthru
      _
    // Predicated region
    $region30: #{projection_head_apply.1} parent=1 // pred_check
      _
    $region31: #{projection_head_apply.1} parent=1 // pred_check_branch
      %60 = sbr.rel (0) target = $region33
    $region32: #{projection_head_apply.1} parent=1 // pred_region
      %61 = dma.done [#allocation6], 2048
    $region33: #{projection_head_apply.1} parent=1 // pred_fallthru
      _
    %v62 = vld [vmem:[#allocation2] sm:$0xff]
    %v63 = vld [vmem:[#allocation2 + $0x8] sm:$0xff]
    %v64 = vld [vmem:[#allocation5] sm:$0xff]
    %v65 = vld [vmem:[#allocation5 + $0x8] sm:$0xff]
    %v66 = vld [vmem:[#allocation5 + $0x10] sm:$0xff]
    %v67 = vld [vmem:[#allocation5 + $0x18] sm:$0xff]
    %v68 = vld [vmem:[%s2] sm:$0x1]
    %v70 = vlaneseq
    %v71 = vshrl.u32 %v70, 7
    %v72 = vsub.s32 0, %v71
    %v73 = vrot.slane %v68, %v72
    %vm75 = vcmask 261120
    %v77 = vsel %vm75, %v62, 0
    %v80 = vsel %vm75, %v63, 0
    %82 = vmatprep.subr.mxu0 0.0
    %83 = vmatpush1.msra.mxu0 %v64
    %84 = vmatprep.subr.mxu0 0.0
    %85 = vmatpush1.msra.mxu0 %v65
    %86 = vmatprep.subr.mxu0 0.0
    %87 = vmatpush1.msra.mxu0 %v66
    %88 = vmatprep.subr.mxu0 0.0
    %89 = vmatpush1.msra.mxu0 %v67
    %90 = vmatprep.subr.mxu0 0.0
    %91 = vmatpush1.msra.mxu0 0.0
    %92 = vmatprep.subr.mxu0 0.0
    %93 = vmatpush1.msra.mxu0 0.0
    %94 = vmatprep.subr.mxu0 0.0
    %95 = vmatpush1.msra.mxu0 0.0
    %96 = vmatprep.subr.mxu0 0.0
    %97 = vmatpush1.msra.mxu0 0.0
    %98 = vmatprep.subr.mxu0 0.0
    %99 = vmatpush1.msra.mxu0 0.0
    %100 = vmatprep.subr.mxu0 0.0
    %101 = vmatpush1.msra.mxu0 0.0
    %102 = vmatprep.subr.mxu0 0.0
    %103 = vmatpush1.msra.mxu0 0.0
    %104 = vmatprep.subr.mxu0 0.0
    %105 = vmatpush1.msra.mxu0 0.0
    %106 = vmatprep.subr.mxu0 0.0
    %107 = vmatpush1.msra.mxu0 0.0
    %108 = vmatprep.subr.mxu0 0.0
    %109 = vmatpush1.msra.mxu0 0.0
    %110 = vmatprep.subr.mxu0 0.0
    %111 = vmatpush1.msra.mxu0 0.0
    %112 = vmatprep.subr.mxu0 0.0
    %113 = vmatpush1.msra.mxu0 0.0
    %114 = vmatprep.subr.mxu0 0.0
    %115 = vmatpush1.msra.mxu0 0.0
    %116 = vmatprep.subr.mxu0 0.0
    %117 = vmatpush1.msra.mxu0 0.0
    %118 = vmatprep.subr.mxu0 0.0
    %119 = vmatpush1.msra.mxu0 0.0
    %120 = vmatprep.subr.mxu0 0.0
    %121 = vmatpush1.msra.mxu0 0.0
    %122 = vmatprep.subr.mxu0 0.0
    %123 = vmatpush1.msra.mxu0 0.0
    %124 = vmatprep.subr.mxu0 0.0
    %125 = vmatpush1.msra.mxu0 0.0
    %126 = vmatprep.subr.mxu0 0.0
    %127 = vmatpush1.msra.mxu0 0.0
    %128 = vmatprep.subr.mxu0 0.0
    %129 = vmatpush1.msra.mxu0 0.0
    %130 = vmatprep.subr.mxu0 0.0
    %131 = vmatpush1.msra.mxu0 0.0
    %132 = vmatprep.subr.mxu0 0.0
    %133 = vmatpush1.msra.mxu0 0.0
    %134 = vmatprep.subr.mxu0 0.0
    %135 = vmatpush1.msra.mxu0 0.0
    %136 = vmatprep.subr.mxu0 0.0
    %137 = vmatpush1.msra.mxu0 0.0
    %138 = vmatprep.subr.mxu0 0.0
    %139 = vmatpush1.msra.mxu0 0.0
    %140 = vmatprep.subr.mxu0 0.0
    %141 = vmatpush1.msra.mxu0 0.0
    %142 = vmatprep.subr.mxu0 0.0
    %143 = vmatpush1.msra.mxu0 0.0
    %144 = vmatprep.subr.mxu0 0.0
    %145 = vmatpush1.msra.mxu0 0.0
    %146 = vmatprep.mubr.f32.mxu0 0.0
    %147 = vmatmul.mubr.f32.gmra.mrb[0].mxu0 %v77
    %v148 = vpop.f32.mrb[0].mxu0
    %v149 = vadd.f32 %v73, %v148
    %v150 = vpop.f32.mrb[0].mxu0
    %151 = vmatprep.mubr.f32.mxu0 0.0
    %152 = vmatmul.mubr.f32.gmra.mrb[0].mxu0 %v80
    %v153 = vpop.f32.mrb[0].mxu0
    %v154 = vadd.f32 %v73, %v153
    %v155 = vpop.f32.mrb[0].mxu0
    %156 = vdwg.mxu0
    %v157 = vmax.f32 %v149, 0.0
    %v158 = vmax.f32 %v154, 0.0
    %v159 = vld [vmem:[#allocation7] sm:$0xff]
    %v160 = vld [vmem:[#allocation7 + $0x8] sm:$0xff]
    %v161 = vld [vmem:[#allocation7 + $0x10] sm:$0xff]
    %v162 = vld [vmem:[#allocation7 + $0x18] sm:$0xff]
    %v163 = vld [vmem:[#allocation7 + $0x20] sm:$0xff]
    %v164 = vld [vmem:[#allocation7 + $0x28] sm:$0xff]
    %v165 = vld [vmem:[#allocation7 + $0x30] sm:$0xff]
    %v166 = vld [vmem:[#allocation7 + $0x38] sm:$0xff]
    %v167 = vld [vmem:[#allocation7 + $0x40] sm:$0xff]
    %v168 = vld [vmem:[#allocation7 + $0x48] sm:$0xff]
    %v169 = vld [vmem:[#allocation7 + $0x50] sm:$0xff]
    %v170 = vld [vmem:[#allocation7 + $0x58] sm:$0xff]
    %v171 = vld [vmem:[#allocation7 + $0x60] sm:$0xff]
    %v172 = vld [vmem:[#allocation7 + $0x68] sm:$0xff]
    %v173 = vld [vmem:[#allocation7 + $0x70] sm:$0xff]
    %v174 = vld [vmem:[#allocation7 + $0x78] sm:$0xff]
    %v175 = vld [vmem:[%s4] sm:$0x1]
    %v177 = vlaneseq
    %v178 = vshrl.u32 %v177, 7
    %v179 = vsub.s32 0, %v178
    %v180 = vrot.slane %v175, %v179
    %182 = vmatprep.subr.mxu0 0.0
    %183 = vmatpush1.msra.mxu0 %v159
    %184 = vmatprep.subr.mxu0 0.0
    %185 = vmatpush1.msra.mxu0 %v160
    %186 = vmatprep.subr.mxu0 0.0
    %187 = vmatpush1.msra.mxu0 %v161
    %188 = vmatprep.subr.mxu0 0.0
    %189 = vmatpush1.msra.mxu0 %v162
    %190 = vmatprep.subr.mxu0 0.0
    %191 = vmatpush1.msra.mxu0 %v163
    %192 = vmatprep.subr.mxu0 0.0
    %193 = vmatpush1.msra.mxu0 %v164
    %194 = vmatprep.subr.mxu0 0.0
    %195 = vmatpush1.msra.mxu0 %v165
    %196 = vmatprep.subr.mxu0 0.0
    %197 = vmatpush1.msra.mxu0 %v166
    %198 = vmatprep.subr.mxu0 0.0
    %199 = vmatpush1.msra.mxu0 %v167
    %200 = vmatprep.subr.mxu0 0.0
    %201 = vmatpush1.msra.mxu0 %v168
    %202 = vmatprep.subr.mxu0 0.0
    %203 = vmatpush1.msra.mxu0 %v169
    %204 = vmatprep.subr.mxu0 0.0
    %205 = vmatpush1.msra.mxu0 %v170
    %206 = vmatprep.subr.mxu0 0.0
    %207 = vmatpush1.msra.mxu0 %v171
    %208 = vmatprep.subr.mxu0 0.0
    %209 = vmatpush1.msra.mxu0 %v172
    %210 = vmatprep.subr.mxu0 0.0
    %211 = vmatpush1.msra.mxu0 %v173
    %212 = vmatprep.subr.mxu0 0.0
    %213 = vmatpush1.msra.mxu0 %v174
    %214 = vmatprep.subr.mxu0 0.0
    %215 = vmatpush1.msra.mxu0 0.0
    %216 = vmatprep.subr.mxu0 0.0
    %217 = vmatpush1.msra.mxu0 0.0
    %218 = vmatprep.subr.mxu0 0.0
    %219 = vmatpush1.msra.mxu0 0.0
    %220 = vmatprep.subr.mxu0 0.0
    %221 = vmatpush1.msra.mxu0 0.0
    %222 = vmatprep.subr.mxu0 0.0
    %223 = vmatpush1.msra.mxu0 0.0
    %224 = vmatprep.subr.mxu0 0.0
    %225 = vmatpush1.msra.mxu0 0.0
    %226 = vmatprep.subr.mxu0 0.0
    %227 = vmatpush1.msra.mxu0 0.0
    %228 = vmatprep.subr.mxu0 0.0
    %229 = vmatpush1.msra.mxu0 0.0
    %230 = vmatprep.subr.mxu0 0.0
    %231 = vmatpush1.msra.mxu0 0.0
    %232 = vmatprep.subr.mxu0 0.0
    %233 = vmatpush1.msra.mxu0 0.0
    %234 = vmatprep.subr.mxu0 0.0
    %235 = vmatpush1.msra.mxu0 0.0
    %236 = vmatprep.subr.mxu0 0.0
    %237 = vmatpush1.msra.mxu0 0.0
    %238 = vmatprep.subr.mxu0 0.0
    %239 = vmatpush1.msra.mxu0 0.0
    %240 = vmatprep.subr.mxu0 0.0
    %241 = vmatpush1.msra.mxu0 0.0
    %242 = vmatprep.subr.mxu0 0.0
    %243 = vmatpush1.msra.mxu0 0.0
    %244 = vmatprep.subr.mxu0 0.0
    %245 = vmatpush1.msra.mxu0 0.0
    %246 = vmatprep.mubr.f32.mxu0 0.0
    %247 = vmatmul.mubr.f32.gmra.mrb[0].mxu0 %v157
    %v248 = vpop.f32.mrb[0].mxu0
    %v249 = vadd.f32 %v180, %v248
    %v250 = vpop.f32.mrb[0].mxu0
    %251 = vmatprep.mubr.f32.mxu0 0.0
    %252 = vmatmul.mubr.f32.gmra.mrb[0].mxu0 %v158
    %v253 = vpop.f32.mrb[0].mxu0
    %v254 = vadd.f32 %v180, %v253
    %v255 = vpop.f32.mrb[0].mxu0
    %256 = vdwg.mxu0
    %257 = vst [vmem:[#allocation8] sm:$0xff] %v249
    %258 = vst [vmem:[#allocation8 + $0x8] sm:$0xff] %v254
    // Predicated region
    $region34: #{projection_head_apply.1} parent=1 // pred_check
      _
    $region35: #{projection_head_apply.1} parent=1 // pred_check_branch
      %260 = sbr.rel (0) target = $region37
    $region36: #{projection_head_apply.1} parent=1 // pred_region
      %s262 = ssub.s32 256, 128
      %263 = vsyncadd [#allocation4], %s262
      %s264 = sshll.u32 [#allocation8], 4
      %s265 = int_to_ptr.vmem [resolvable:$true] %s264
      %270 = dma.vmem_to_hbm [thread:$0]  %s265, 128, %s5, [#allocation4], 128, 128, 8
    $region37: #{projection_head_apply.1} parent=1 // pred_fallthru
      _
    // Predicated region
    $region38: #{projection_head_apply.1} parent=1 // pred_check
      _
    $region39: #{projection_head_apply.1} parent=1 // pred_check_branch
      %272 = sbr.rel (0) target = $region41
    $region40: #{projection_head_apply.1} parent=1 // pred_region
      %273 = dma.done [#allocation4], 256
    $region41: #{projection_head_apply.1} parent=1 // pred_fallthru
      _
    %274 = vsyncpa [#allocation3], 1
    %275 = vsyncpa [#allocation6], 1
    %276 = vsyncpa [#allocation4], 1

</llo_original>
